<compile_context>
chip_gen: v7x
topology: tpu7x:2x2x1
jax: 0.10.0
libtpu: 0.0.40
codegen_flags: <defaults>
</compile_context>

<pallas_src>
import functools

import jax
import jax.numpy as jnp
from jax.experimental import pallas as pl
from jax.experimental.pallas import tpu as pltpu


def _round_up(n: int, m: int) -> int:
    return ((n + m - 1) // m) * m


def _mlp_kernel(x_ref, w1_ref, b1_ref, w2_ref, b2_ref, w3_ref, b3_ref, out_ref):
    """Fused 3-layer MLP on one batch tile.

    x_ref: (TB, Din) bf16; w*_ref: bf16 (resident); b*_ref: (1, F) f32.
    Matmuls hit the MXU in bf16 with f32 accumulation; bias/ReLU on the VPU in f32.
    """
    x = x_ref[...]                      # (TB, Din) bf16
    b1 = b1_ref[...]                    # (1, H) f32 -- read once, broadcast on add
    b2 = b2_ref[...]
    b3 = b3_ref[...]

    # fc1 + relu
    h1 = jnp.dot(x, w1_ref[...], preferred_element_type=jnp.float32) + b1
    h1 = jnp.maximum(h1, 0.0)
    # dropout (inference mode) -> identity

    # fc2 + relu
    h2 = jnp.dot(h1.astype(w2_ref.dtype), w2_ref[...],
                 preferred_element_type=jnp.float32) + b2
    h2 = jnp.maximum(h2, 0.0)
    # dropout (inference mode) -> identity

    # fc3 (logits)
    out = jnp.dot(h2.astype(w3_ref.dtype), w3_ref[...],
                  preferred_element_type=jnp.float32) + b3
    out_ref[...] = out.astype(out_ref.dtype)


@functools.partial(jax.jit, static_argnames=("block_batch",))
def mlp_classifier_forward(x, w1, b1, w2, b2, w3, b3, *, block_batch=512):
    """x: (B, D_in) f32.  Returns logits (B, num_classes) f32."""
    batch, d_in = x.shape
    hidden = w1.shape[1]
    n_cls = w3.shape[1]

    # Lane-dense padding: every matmul K/N dim padded to a multiple of 128.
    d_in_p = _round_up(d_in, 128)
    hid_p = _round_up(hidden, 128)
    cls_p = _round_up(n_cls, 128)

    # Batch tile: largest of (block_batch, batch rounded to sublane multiple of 8),
    # batch padded to a whole number of tiles.
    tb = min(block_batch, _round_up(batch, 8))
    batch_p = _round_up(batch, tb)

    cdt = jnp.bfloat16  # MXU-native compute dtype on v5e/v6e/v7x

    # Pad + cast once in the wrapper (zero padding keeps the math exact:
    # padded K rows/cols contribute 0, padded output cols are sliced off).
    xp = jnp.zeros((batch_p, d_in_p), cdt).at[:batch, :d_in].set(x.astype(cdt))
    w1p = jnp.zeros((d_in_p, hid_p), cdt).at[:d_in, :hidden].set(w1.astype(cdt))
    b1p = jnp.zeros((1, hid_p), jnp.float32).at[:, :hidden].set(b1)
    w2p = jnp.zeros((hid_p, hid_p), cdt).at[:hidden, :hidden].set(w2.astype(cdt))
    b2p = jnp.zeros((1, hid_p), jnp.float32).at[:, :hidden].set(b2)
    w3p = jnp.zeros((hid_p, cls_p), cdt).at[:hidden, :n_cls].set(w3.astype(cdt))
    b3p = jnp.zeros((1, cls_p), jnp.float32).at[:, :n_cls].set(b3)

    grid = (batch_p // tb,)

    flops = 2 * batch_p * (d_in_p * hid_p + hid_p * hid_p + hid_p * cls_p)
    bytes_accessed = (
        xp.size * 2 + w1p.size * 2 + w2p.size * 2 + w3p.size * 2
        + (b1p.size + b2p.size + b3p.size) * 4
        + batch_p * cls_p * 4
    )

    out_padded = pl.pallas_call(
        _mlp_kernel,
        out_shape=jax.ShapeDtypeStruct((batch_p, cls_p), jnp.float32),
        grid=grid,
        in_specs=[
            # Streamed batch tile.
            pl.BlockSpec((tb, d_in_p), lambda i: (i, 0)),
            # Weights / biases: constant index map -> resident in VMEM, DMA'd once.
            pl.BlockSpec(w1p.shape, lambda i: (0, 0)),
            pl.BlockSpec(b1p.shape, lambda i: (0, 0)),
            pl.BlockSpec(w2p.shape, lambda i: (0, 0)),
            pl.BlockSpec(b2p.shape, lambda i: (0, 0)),
            pl.BlockSpec(w3p.shape, lambda i: (0, 0)),
            pl.BlockSpec(b3p.shape, lambda i: (0, 0)),
        ],
        out_specs=pl.BlockSpec((tb, cls_p), lambda i: (i, 0)),
        compiler_params=pltpu.CompilerParams(
            dimension_semantics=("parallel",),
        ),
        cost_estimate=pl.CostEstimate(
            flops=flops, transcendentals=0, bytes_accessed=bytes_accessed
        ),
    )(xp, w1p, b1p, w2p, b2p, w3p, b3p)

    return out_padded[:batch, :n_cls]


def init_params(key, input_size, hidden_size, num_classes):
    """Deterministic PyTorch-style Linear init: U(-1/sqrt(fan_in), 1/sqrt(fan_in)).

    Weights stored as (in_features, out_features); biases as (1, out_features)."""
    ks = jax.random.split(key, 6)

    def linear(kw, kb, fan_in, fan_out):
        bound = 1.0 / jnp.sqrt(jnp.float32(fan_in))
        w = jax.random.uniform(kw, (fan_in, fan_out), jnp.float32, -bound, bound)
        b = jax.random.uniform(kb, (1, fan_out), jnp.float32, -bound, bound)
        return w, b

    w1, b1 = linear(ks[0], ks[1], input_size, hidden_size)
    w2, b2 = linear(ks[2], ks[3], hidden_size, hidden_size)
    w3, b3 = linear(ks[4], ks[5], hidden_size, num_classes)
    return w1, b1, w2, b2, w3, b3


def _reference_forward(x, w1, b1, w2, b2, w3, b3):
    """Plain-JAX reference using the same bf16-matmul / f32-accumulate recipe."""
    bf = jnp.bfloat16
    h1 = jnp.maximum(
        jnp.dot(x.astype(bf), w1.astype(bf), preferred_element_type=jnp.float32) + b1, 0.0)
    h2 = jnp.maximum(
        jnp.dot(h1.astype(bf), w2.astype(bf), preferred_element_type=jnp.float32) + b2, 0.0)
    return jnp.dot(h2.astype(bf), w3.astype(bf), preferred_element_type=jnp.float32) + b3


if __name__ == "__main__":
    # Small shapes consistent with the module (real module: input=1000, hidden=512,
    # classes=90; scaled down for a quick test).  Note: at these toy sizes the call
    # is launch-overhead-bound; benchmark/tune at B>=512, input=1000, hidden=512.
    batch = 8
    input_size = 128
    hidden_size = 128
    num_classes = 32

    key = jax.random.PRNGKey(0)
    k_x, k_p = jax.random.split(key)

    x = jax.random.normal(k_x, (batch, input_size), jnp.float32)
    params = init_params(k_p, input_size, hidden_size, num_classes)

    out = mlp_classifier_forward(x, *params)
    out = jax.block_until_ready(out)

    ref = _reference_forward(x, *params)
    assert out.shape == (batch, num_classes), f"bad shape {out.shape}"
    assert jnp.allclose(out, ref, atol=2e-2, rtol=2e-2), "mismatch vs reference"

    print("KERNEL_OK")
</pallas_src>

<mosaic_0001>
module attributes {stable_mosaic.version = 11 : i64} {
  func.func @_mlp_kernel(%arg0: i32, %arg1: memref<8x128xbf16, #tpu.memory_space<vmem>>, %arg2: memref<128x128xbf16, #tpu.memory_space<vmem>>, %arg3: memref<1x128xf32, #tpu.memory_space<vmem>>, %arg4: memref<128x128xbf16, #tpu.memory_space<vmem>>, %arg5: memref<1x128xf32, #tpu.memory_space<vmem>>, %arg6: memref<128x128xbf16, #tpu.memory_space<vmem>>, %arg7: memref<1x128xf32, #tpu.memory_space<vmem>>, %arg8: memref<8x128xf32, #tpu.memory_space<vmem>>) attributes {dimension_semantics = [#tpu.dimension_semantics<parallel>], iteration_bounds = array<i64: 1>, scalar_prefetch = 0 : i64, scratch_operands = 0 : i64, tpu.core_type = #tpu.core_type<tc>, window_params = [{transform_indices = @transform_0, window_bounds = array<i64: 8, 128>}, {pipeline_mode = #tpu.pipeline_mode<synchronous>, transform_indices = @transform_1, window_bounds = array<i64: 128, 128>}, {pipeline_mode = #tpu.pipeline_mode<synchronous>, transform_indices = @transform_2, window_bounds = array<i64: 1, 128>}, {pipeline_mode = #tpu.pipeline_mode<synchronous>, transform_indices = @transform_3, window_bounds = array<i64: 128, 128>}, {pipeline_mode = #tpu.pipeline_mode<synchronous>, transform_indices = @transform_4, window_bounds = array<i64: 1, 128>}, {pipeline_mode = #tpu.pipeline_mode<synchronous>, transform_indices = @transform_5, window_bounds = array<i64: 128, 128>}, {pipeline_mode = #tpu.pipeline_mode<synchronous>, transform_indices = @transform_6, window_bounds = array<i64: 1, 128>}, {transform_indices = @transform_7, window_bounds = array<i64: 8, 128>}]} {
    %c0 = arith.constant 0 : index
    %c0_0 = arith.constant 0 : index
    %0 = vector.load %arg1[%c0, %c0_0] : memref<8x128xbf16, #tpu.memory_space<vmem>>, vector<8x128xbf16>
    %c0_1 = arith.constant 0 : index
    %c0_2 = arith.constant 0 : index
    %1 = vector.load %arg3[%c0_1, %c0_2] : memref<1x128xf32, #tpu.memory_space<vmem>>, vector<1x128xf32>
    %c0_3 = arith.constant 0 : index
    %c0_4 = arith.constant 0 : index
    %2 = vector.load %arg5[%c0_3, %c0_4] : memref<1x128xf32, #tpu.memory_space<vmem>>, vector<1x128xf32>
    %c0_5 = arith.constant 0 : index
    %c0_6 = arith.constant 0 : index
    %3 = vector.load %arg7[%c0_5, %c0_6] : memref<1x128xf32, #tpu.memory_space<vmem>>, vector<1x128xf32>
    %c0_7 = arith.constant 0 : index
    %c0_8 = arith.constant 0 : index
    %4 = vector.load %arg2[%c0_7, %c0_8] : memref<128x128xbf16, #tpu.memory_space<vmem>>, vector<128x128xbf16>
    %cst = arith.constant dense<0.000000e+00> : vector<8x128xf32>
    %5 = tpu.matmul %0, %4, %cst {dimension_numbers = #tpu.dot_dimension_numbers<[1], [0], [0], [1], [0, 0, 1, 1], [], []>} : vector<8x128xbf16>, vector<128x128xbf16>, vector<8x128xf32> -> vector<8x128xf32>
    %6 = vector.broadcast %1 : vector<1x128xf32> to vector<8x128xf32>
    %7 = arith.addf %5, %6 : vector<8x128xf32>
    %cst_9 = arith.constant 0.000000e+00 : f32
    %8 = vector.broadcast %cst_9 : f32 to vector<8x128xf32>
    %9 = arith.maximumf %7, %8 : vector<8x128xf32>
    %10 = arith.truncf %9 : vector<8x128xf32> to vector<8x128xbf16>
    %c0_10 = arith.constant 0 : index
    %c0_11 = arith.constant 0 : index
    %11 = vector.load %arg4[%c0_10, %c0_11] : memref<128x128xbf16, #tpu.memory_space<vmem>>, vector<128x128xbf16>
    %cst_12 = arith.constant dense<0.000000e+00> : vector<8x128xf32>
    %12 = tpu.matmul %10, %11, %cst_12 {dimension_numbers = #tpu.dot_dimension_numbers<[1], [0], [0], [1], [0, 0, 1, 1], [], []>} : vector<8x128xbf16>, vector<128x128xbf16>, vector<8x128xf32> -> vector<8x128xf32>
    %13 = vector.broadcast %2 : vector<1x128xf32> to vector<8x128xf32>
    %14 = arith.addf %12, %13 : vector<8x128xf32>
    %cst_13 = arith.constant 0.000000e+00 : f32
    %15 = vector.broadcast %cst_13 : f32 to vector<8x128xf32>
    %16 = arith.maximumf %14, %15 : vector<8x128xf32>
    %17 = arith.truncf %16 : vector<8x128xf32> to vector<8x128xbf16>
    %c0_14 = arith.constant 0 : index
    %c0_15 = arith.constant 0 : index
    %18 = vector.load %arg6[%c0_14, %c0_15] : memref<128x128xbf16, #tpu.memory_space<vmem>>, vector<128x128xbf16>
    %cst_16 = arith.constant dense<0.000000e+00> : vector<8x128xf32>
    %19 = tpu.matmul %17, %18, %cst_16 {dimension_numbers = #tpu.dot_dimension_numbers<[1], [0], [0], [1], [0, 0, 1, 1], [], []>} : vector<8x128xbf16>, vector<128x128xbf16>, vector<8x128xf32> -> vector<8x128xf32>
    %20 = vector.broadcast %3 : vector<1x128xf32> to vector<8x128xf32>
    %21 = arith.addf %19, %20 : vector<8x128xf32>
    %c0_17 = arith.constant 0 : index
    %c0_18 = arith.constant 0 : index
    %22 = vector.load %arg8[%c0_17, %c0_18] : memref<8x128xf32, #tpu.memory_space<vmem>>, vector<8x128xf32>
    tpu.vector_store %arg8[%c0_17, %c0_18], %21 {strides = array<i32>} : memref<8x128xf32, #tpu.memory_space<vmem>>, vector<8x128xf32>,
    return
  }
  func.func @transform_0(%arg0: i32) -> (i32, i32) {
    %c0_i32 = arith.constant 0 : i32
    %c0_i32_0 = arith.constant 0 : i32
    return %arg0, %c0_i32 : i32, i32
  }
  func.func @transform_1(%arg0: i32) -> (i32, i32) {
    %c0_i32 = arith.constant 0 : i32
    %c0_i32_0 = arith.constant 0 : i32
    %c0_i32_1 = arith.constant 0 : i32
    return %c0_i32, %c0_i32_0 : i32, i32
  }
  func.func @transform_2(%arg0: i32) -> (i32, i32) {
    %c0_i32 = arith.constant 0 : i32
    %c0_i32_0 = arith.constant 0 : i32
    %c0_i32_1 = arith.constant 0 : i32
    return %c0_i32, %c0_i32_0 : i32, i32
  }
  func.func @transform_3(%arg0: i32) -> (i32, i32) {
    %c0_i32 = arith.constant 0 : i32
    %c0_i32_0 = arith.constant 0 : i32
    %c0_i32_1 = arith.constant 0 : i32
    return %c0_i32, %c0_i32_0 : i32, i32
  }
  func.func @transform_4(%arg0: i32) -> (i32, i32) {
    %c0_i32 = arith.constant 0 : i32
    %c0_i32_0 = arith.constant 0 : i32
    %c0_i32_1 = arith.constant 0 : i32
    return %c0_i32, %c0_i32_0 : i32, i32
  }
  func.func @transform_5(%arg0: i32) -> (i32, i32) {
    %c0_i32 = arith.constant 0 : i32
    %c0_i32_0 = arith.constant 0 : i32
    %c0_i32_1 = arith.constant 0 : i32
    return %c0_i32, %c0_i32_0 : i32, i32
  }
  func.func @transform_6(%arg0: i32) -> (i32, i32) {
    %c0_i32 = arith.constant 0 : i32
    %c0_i32_0 = arith.constant 0 : i32
    %c0_i32_1 = arith.constant 0 : i32
    return %c0_i32, %c0_i32_0 : i32, i32
  }
  func.func @transform_7(%arg0: i32) -> (i32, i32) {
    %c0_i32 = arith.constant 0 : i32
    %c0_i32_0 = arith.constant 0 : i32
    return %arg0, %c0_i32 : i32, i32
  }
}

</mosaic_0001>

<llo_original>
// kernel: mlp_classifier_forward.1
$region0: #{mlp_classifier_forward.1}
  #allocation0 [shape = 'u32[]', space=smem, size = 0x4, offset = 0x4, fixed_abs, tag = 'smem constant byte address 0x4 - core index']
  #allocation1 [shape = 'u32[144,128]{1,0:T(1,128)}', space=vmem, size = 0x12000, scoped, tag = 'internal scratch']
  %s0 = inlined_call_operand.vmem [shape: bf16[8,128], index: 0, kind: input, shape index: {}]
  %s1 = inlined_call_operand.vmem [shape: bf16[128,128], index: 1, kind: input, shape index: {}]
  %s2 = inlined_call_operand.vmem [shape: f32[1,128], index: 2, kind: input, shape index: {}]
  %s3 = inlined_call_operand.vmem [shape: bf16[128,128], index: 3, kind: input, shape index: {}]
  %s4 = inlined_call_operand.vmem [shape: f32[1,128], index: 4, kind: input, shape index: {}]
  %s5 = inlined_call_operand.vmem [shape: bf16[128,128], index: 5, kind: input, shape index: {}]
  %s6 = inlined_call_operand.vmem [shape: f32[1,128], index: 6, kind: input, shape index: {}]
  %s7 = inlined_call_operand.hbm [shape: f32[8,128], index: 7, kind: output, shape index: {}]
  %s8 = sld [smem:[#allocation0]]
  $region38: #{mlp_classifier_forward.1} parent=0
    _
  %s10 = ssub.s32 1, %s8
  %s11 = scalar_select 0, %s10, %s8
  $region1: #{mlp_classifier_forward.1} parent=0
    #allocation2 [shape = 'u8[4096]{0}', space=vmem, size = 0x1000, scoped, tag = 'output window, operand 0, single buffered']
    #allocation3 [shape = 's32[1]{0}', space=sflag, size = 0x4, scoped, tag = 'scoped memory for mlp_classifier_forward.1']
    %12 = vsyncpa [#allocation3], 0
    // Predicated region
    $region2: #{mlp_classifier_forward.1} parent=1 // pred_check
      _
    $region3: #{mlp_classifier_forward.1} parent=1 // pred_check_branch
      %14 = sbr.rel (0) target = $region5
    $region4: #{mlp_classifier_forward.1} parent=1 // pred_region
      _
    $region5: #{mlp_classifier_forward.1} parent=1 // pred_fallthru
      _
    // Predicated region
    $region6: #{mlp_classifier_forward.1} parent=1 // pred_check
      _
    $region7: #{mlp_classifier_forward.1} parent=1 // pred_check_branch
      %16 = sbr.rel (0) target = $region9
    $region8: #{mlp_classifier_forward.1} parent=1 // pred_region
      _
    $region9: #{mlp_classifier_forward.1} parent=1 // pred_fallthru
      _
    // Predicated region
    $region10: #{mlp_classifier_forward.1} parent=1 // pred_check
      _
    $region11: #{mlp_classifier_forward.1} parent=1 // pred_check_branch
      %18 = sbr.rel (0) target = $region13
    $region12: #{mlp_classifier_forward.1} parent=1 // pred_region
      _
    $region13: #{mlp_classifier_forward.1} parent=1 // pred_fallthru
      _
    // Predicated region
    $region14: #{mlp_classifier_forward.1} parent=1 // pred_check
      _
    $region15: #{mlp_classifier_forward.1} parent=1 // pred_check_branch
      %20 = sbr.rel (0) target = $region17
    $region16: #{mlp_classifier_forward.1} parent=1 // pred_region
      _
    $region17: #{mlp_classifier_forward.1} parent=1 // pred_fallthru
      _
    // Predicated region
    $region18: #{mlp_classifier_forward.1} parent=1 // pred_check
      _
    $region19: #{mlp_classifier_forward.1} parent=1 // pred_check_branch
      %22 = sbr.rel (0) target = $region21
    $region20: #{mlp_classifier_forward.1} parent=1 // pred_region
      _
    $region21: #{mlp_classifier_forward.1} parent=1 // pred_fallthru
      _
    // Predicated region
    $region22: #{mlp_classifier_forward.1} parent=1 // pred_check
      _
    $region23: #{mlp_classifier_forward.1} parent=1 // pred_check_branch
      %24 = sbr.rel (0) target = $region25
    $region24: #{mlp_classifier_forward.1} parent=1 // pred_region
      _
    $region25: #{mlp_classifier_forward.1} parent=1 // pred_fallthru
      _
    // Predicated region
    $region26: #{mlp_classifier_forward.1} parent=1 // pred_check
      _
    $region27: #{mlp_classifier_forward.1} parent=1 // pred_check_branch
      %26 = sbr.rel (0) target = $region29
    $region28: #{mlp_classifier_forward.1} parent=1 // pred_region
      _
    $region29: #{mlp_classifier_forward.1} parent=1 // pred_fallthru
      _
    %v28 = vld [vmem:[%s0] sm:$0xf]
    %v29 = vld [vmem:[%s2] sm:$0x1]
    %v30 = vld [vmem:[%s4] sm:$0x1]
    %v31 = vld [vmem:[%s6] sm:$0x1]
    %v32 = vld [vmem:[%s1] sm:$0xf]
    %v33 = vld [vmem:[%s1 + $0x4] sm:$0xf]
    %v34 = vld [vmem:[%s1 + $0x8] sm:$0xf]
    %v35 = vld [vmem:[%s1 + $0xc] sm:$0xf]
    %v36 = vld [vmem:[%s1 + $0x10] sm:$0xf]
    %v37 = vld [vmem:[%s1 + $0x14] sm:$0xf]
    %v38 = vld [vmem:[%s1 + $0x18] sm:$0xf]
    %v39 = vld [vmem:[%s1 + $0x1c] sm:$0xf]
    %v40 = vld [vmem:[%s1 + $0x20] sm:$0xf]
    %v41 = vld [vmem:[%s1 + $0x24] sm:$0xf]
    %v42 = vld [vmem:[%s1 + $0x28] sm:$0xf]
    %v43 = vld [vmem:[%s1 + $0x2c] sm:$0xf]
    %v44 = vld [vmem:[%s1 + $0x30] sm:$0xf]
    %v45 = vld [vmem:[%s1 + $0x34] sm:$0xf]
    %v46 = vld [vmem:[%s1 + $0x38] sm:$0xf]
    %v47 = vld [vmem:[%s1 + $0x3c] sm:$0xf]
    %v49 = vlaneseq
    %v50 = vshrl.u32 %v49, 7
    %v51 = vsub.s32 0, %v50
    %v52 = vrot.slane %v29, %v51
    %v70 = vunpack.c.l.b16 %v32
    %v71 = vunpack.c.l.b16 %v33
    %v72 = vunpack.c.l.b16 %v34
    %v73 = vunpack.c.l.b16 %v35
    %v74 = vunpack.c.l.b16 %v36
    %v75 = vunpack.c.l.b16 %v37
    %v76 = vunpack.c.l.b16 %v38
    %v77 = vunpack.c.l.b16 %v39
    %v78 = vunpack.c.l.b16 %v40
    %v79 = vunpack.c.l.b16 %v41
    %v80 = vunpack.c.l.b16 %v42
    %v81 = vunpack.c.l.b16 %v43
    %v82 = vunpack.c.l.b16 %v44
    %v83 = vunpack.c.l.b16 %v45
    %v84 = vunpack.c.l.b16 %v46
    %v85 = vunpack.c.l.b16 %v47
    %v86 = vpack.c.b16 %v71, %v70
    %v87 = vpack.c.b16 %v73, %v72
    %v88 = vpack.c.b16 %v75, %v74
    %v89 = vpack.c.b16 %v77, %v76
    %v90 = vpack.c.b16 %v79, %v78
    %v91 = vpack.c.b16 %v81, %v80
    %v92 = vpack.c.b16 %v83, %v82
    %v93 = vpack.c.b16 %v85, %v84
    %102 = vmatprep.subr.bf16.mxu0 0
    %103 = vmatpush1.bf16.msra.mxu0 %v86
    %104 = vmatprep.subr.bf16.mxu0 0
    %105 = vmatpush1.bf16.msra.mxu0 %v87
    %106 = vmatprep.subr.bf16.mxu0 0
    %107 = vmatpush1.bf16.msra.mxu0 %v88
    %108 = vmatprep.subr.bf16.mxu0 0
    %109 = vmatpush1.bf16.msra.mxu0 %v89
    %110 = vmatprep.subr.bf16.mxu0 0
    %111 = vmatpush1.bf16.msra.mxu0 %v90
    %112 = vmatprep.subr.bf16.mxu0 0
    %113 = vmatpush1.bf16.msra.mxu0 %v91
    %114 = vmatprep.subr.bf16.mxu0 0
    %115 = vmatpush1.bf16.msra.mxu0 %v92
    %116 = vmatprep.subr.bf16.mxu0 0
    %117 = vmatpush1.bf16.msra.mxu0 %v93
    %118 = vmatprep.subr.bf16.mxu0 0
    %119 = vmatpush1.bf16.msra.mxu0 0
    %120 = vmatprep.subr.bf16.mxu0 0
    %121 = vmatpush1.bf16.msra.mxu0 0
    %122 = vmatprep.subr.bf16.mxu0 0
    %123 = vmatpush1.bf16.msra.mxu0 0
    %124 = vmatprep.subr.bf16.mxu0 0
    %125 = vmatpush1.bf16.msra.mxu0 0
    %126 = vmatprep.subr.bf16.mxu0 0
    %127 = vmatpush1.bf16.msra.mxu0 0
    %128 = vmatprep.subr.bf16.mxu0 0
    %129 = vmatpush1.bf16.msra.mxu0 0
    %130 = vmatprep.subr.bf16.mxu0 0
    %131 = vmatpush1.bf16.msra.mxu0 0
    %132 = vmatprep.subr.bf16.mxu0 0
    %133 = vmatpush1.bf16.msra.mxu0 0
    %134 = vmatprep.mubr.bf16.mxu0 0
    %135 = vmatmul.mubr.bf16.gmra.mrb[0].mxu0 %v28
    %v136 = vpop.f32.mrb[0].mxu0
    %v137 = vadd.f32 %v52, %v136
    %v138 = vpop.f32.mrb[0].mxu0
    %v139 = vpop.f32.mrb[0].mxu0
    %v140 = vpop.f32.mrb[0].mxu0
    %141 = vdwg.mxu0
    %v142 = vmax.f32 %v137, 0.0
    %v143 = vpack.c.bf16 %v142, %v142
    %v144 = vld [vmem:[%s3] sm:$0xf]
    %v145 = vld [vmem:[%s3 + $0x4] sm:$0xf]
    %v146 = vld [vmem:[%s3 + $0x8] sm:$0xf]
    %v147 = vld [vmem:[%s3 + $0xc] sm:$0xf]
    %v148 = vld [vmem:[%s3 + $0x10] sm:$0xf]
    %v149 = vld [vmem:[%s3 + $0x14] sm:$0xf]
    %v150 = vld [vmem:[%s3 + $0x18] sm:$0xf]
    %v151 = vld [vmem:[%s3 + $0x1c] sm:$0xf]
    %v152 = vld [vmem:[%s3 + $0x20] sm:$0xf]
    %v153 = vld [vmem:[%s3 + $0x24] sm:$0xf]
    %v154 = vld [vmem:[%s3 + $0x28] sm:$0xf]
    %v155 = vld [vmem:[%s3 + $0x2c] sm:$0xf]
    %v156 = vld [vmem:[%s3 + $0x30] sm:$0xf]
    %v157 = vld [vmem:[%s3 + $0x34] sm:$0xf]
    %v158 = vld [vmem:[%s3 + $0x38] sm:$0xf]
    %v159 = vld [vmem:[%s3 + $0x3c] sm:$0xf]
    %v161 = vlaneseq
    %v162 = vshrl.u32 %v161, 7
    %v163 = vsub.s32 0, %v162
    %v164 = vrot.slane %v30, %v163
    %v182 = vunpack.c.l.b16 %v144
    %v183 = vunpack.c.l.b16 %v145
    %v184 = vunpack.c.l.b16 %v146
    %v185 = vunpack.c.l.b16 %v147
    %v186 = vunpack.c.l.b16 %v148
    %v187 = vunpack.c.l.b16 %v149
    %v188 = vunpack.c.l.b16 %v150
    %v189 = vunpack.c.l.b16 %v151
    %v190 = vunpack.c.l.b16 %v152
    %v191 = vunpack.c.l.b16 %v153
    %v192 = vunpack.c.l.b16 %v154
    %v193 = vunpack.c.l.b16 %v155
    %v194 = vunpack.c.l.b16 %v156
    %v195 = vunpack.c.l.b16 %v157
    %v196 = vunpack.c.l.b16 %v158
    %v197 = vunpack.c.l.b16 %v159
    %v198 = vpack.c.b16 %v183, %v182
    %v199 = vpack.c.b16 %v185, %v184
    %v200 = vpack.c.b16 %v187, %v186
    %v201 = vpack.c.b16 %v189, %v188
    %v202 = vpack.c.b16 %v191, %v190
    %v203 = vpack.c.b16 %v193, %v192
    %v204 = vpack.c.b16 %v195, %v194
    %v205 = vpack.c.b16 %v197, %v196
    %214 = vmatprep.subr.bf16.mxu0 0
    %215 = vmatpush1.bf16.msra.mxu0 %v198
    %216 = vmatprep.subr.bf16.mxu0 0
    %217 = vmatpush1.bf16.msra.mxu0 %v199
    %218 = vmatprep.subr.bf16.mxu0 0
    %219 = vmatpush1.bf16.msra.mxu0 %v200
    %220 = vmatprep.subr.bf16.mxu0 0
    %221 = vmatpush1.bf16.msra.mxu0 %v201
    %222 = vmatprep.subr.bf16.mxu0 0
    %223 = vmatpush1.bf16.msra.mxu0 %v202
    %224 = vmatprep.subr.bf16.mxu0 0
    %225 = vmatpush1.bf16.msra.mxu0 %v203
    %226 = vmatprep.subr.bf16.mxu0 0
    %227 = vmatpush1.bf16.msra.mxu0 %v204
    %228 = vmatprep.subr.bf16.mxu0 0
    %229 = vmatpush1.bf16.msra.mxu0 %v205
    %230 = vmatprep.subr.bf16.mxu0 0
    %231 = vmatpush1.bf16.msra.mxu0 0
    %232 = vmatprep.subr.bf16.mxu0 0
    %233 = vmatpush1.bf16.msra.mxu0 0
    %234 = vmatprep.subr.bf16.mxu0 0
    %235 = vmatpush1.bf16.msra.mxu0 0
    %236 = vmatprep.subr.bf16.mxu0 0
    %237 = vmatpush1.bf16.msra.mxu0 0
    %238 = vmatprep.subr.bf16.mxu0 0
    %239 = vmatpush1.bf16.msra.mxu0 0
    %240 = vmatprep.subr.bf16.mxu0 0
    %241 = vmatpush1.bf16.msra.mxu0 0
    %242 = vmatprep.subr.bf16.mxu0 0
    %243 = vmatpush1.bf16.msra.mxu0 0
    %244 = vmatprep.subr.bf16.mxu0 0
    %245 = vmatpush1.bf16.msra.mxu0 0
    %246 = vmatprep.mubr.bf16.mxu0 0
    %247 = vmatmul.mubr.bf16.gmra.mrb[0].mxu0 %v143
    %v248 = vpop.f32.mrb[0].mxu0
    %v249 = vadd.f32 %v164, %v248
    %v250 = vpop.f32.mrb[0].mxu0
    %v251 = vpop.f32.mrb[0].mxu0
    %v252 = vpop.f32.mrb[0].mxu0
    %253 = vdwg.mxu0
    %v254 = vmax.f32 %v249, 0.0
    %v255 = vpack.c.bf16 %v254, %v254
    %v256 = vld [vmem:[%s5] sm:$0xf]
    %v257 = vld [vmem:[%s5 + $0x4] sm:$0xf]
    %v258 = vld [vmem:[%s5 + $0x8] sm:$0xf]
    %v259 = vld [vmem:[%s5 + $0xc] sm:$0xf]
    %v260 = vld [vmem:[%s5 + $0x10] sm:$0xf]
    %v261 = vld [vmem:[%s5 + $0x14] sm:$0xf]
    %v262 = vld [vmem:[%s5 + $0x18] sm:$0xf]
    %v263 = vld [vmem:[%s5 + $0x1c] sm:$0xf]
    %v264 = vld [vmem:[%s5 + $0x20] sm:$0xf]
    %v265 = vld [vmem:[%s5 + $0x24] sm:$0xf]
    %v266 = vld [vmem:[%s5 + $0x28] sm:$0xf]
    %v267 = vld [vmem:[%s5 + $0x2c] sm:$0xf]
    %v268 = vld [vmem:[%s5 + $0x30] sm:$0xf]
    %v269 = vld [vmem:[%s5 + $0x34] sm:$0xf]
    %v270 = vld [vmem:[%s5 + $0x38] sm:$0xf]
    %v271 = vld [vmem:[%s5 + $0x3c] sm:$0xf]
    %v273 = vlaneseq
    %v274 = vshrl.u32 %v273, 7
    %v275 = vsub.s32 0, %v274
    %v276 = vrot.slane %v31, %v275
    %v294 = vunpack.c.l.b16 %v256
    %v295 = vunpack.c.l.b16 %v257
    %v296 = vunpack.c.l.b16 %v258
    %v297 = vunpack.c.l.b16 %v259
    %v298 = vunpack.c.l.b16 %v260
    %v299 = vunpack.c.l.b16 %v261
    %v300 = vunpack.c.l.b16 %v262
    %v301 = vunpack.c.l.b16 %v263
    %v302 = vunpack.c.l.b16 %v264
    %v303 = vunpack.c.l.b16 %v265
    %v304 = vunpack.c.l.b16 %v266
    %v305 = vunpack.c.l.b16 %v267
    %v306 = vunpack.c.l.b16 %v268
    %v307 = vunpack.c.l.b16 %v269
    %v308 = vunpack.c.l.b16 %v270
    %v309 = vunpack.c.l.b16 %v271
    %v310 = vpack.c.b16 %v295, %v294
    %v311 = vpack.c.b16 %v297, %v296
    %v312 = vpack.c.b16 %v299, %v298
    %v313 = vpack.c.b16 %v301, %v300
    %v314 = vpack.c.b16 %v303, %v302
    %v315 = vpack.c.b16 %v305, %v304
    %v316 = vpack.c.b16 %v307, %v306
    %v317 = vpack.c.b16 %v309, %v308
    %326 = vmatprep.subr.bf16.mxu0 0
    %327 = vmatpush1.bf16.msra.mxu0 %v310
    %328 = vmatprep.subr.bf16.mxu0 0
    %329 = vmatpush1.bf16.msra.mxu0 %v311
    %330 = vmatprep.subr.bf16.mxu0 0
    %331 = vmatpush1.bf16.msra.mxu0 %v312
    %332 = vmatprep.subr.bf16.mxu0 0
    %333 = vmatpush1.bf16.msra.mxu0 %v313
    %334 = vmatprep.subr.bf16.mxu0 0
    %335 = vmatpush1.bf16.msra.mxu0 %v314
    %336 = vmatprep.subr.bf16.mxu0 0
    %337 = vmatpush1.bf16.msra.mxu0 %v315
    %338 = vmatprep.subr.bf16.mxu0 0
    %339 = vmatpush1.bf16.msra.mxu0 %v316
    %340 = vmatprep.subr.bf16.mxu0 0
    %341 = vmatpush1.bf16.msra.mxu0 %v317
    %342 = vmatprep.subr.bf16.mxu0 0
    %343 = vmatpush1.bf16.msra.mxu0 0
    %344 = vmatprep.subr.bf16.mxu0 0
    %345 = vmatpush1.bf16.msra.mxu0 0
    %346 = vmatprep.subr.bf16.mxu0 0
    %347 = vmatpush1.bf16.msra.mxu0 0
    %348 = vmatprep.subr.bf16.mxu0 0
    %349 = vmatpush1.bf16.msra.mxu0 0
    %350 = vmatprep.subr.bf16.mxu0 0
    %351 = vmatpush1.bf16.msra.mxu0 0
    %352 = vmatprep.subr.bf16.mxu0 0
    %353 = vmatpush1.bf16.msra.mxu0 0
    %354 = vmatprep.subr.bf16.mxu0 0
    %355 = vmatpush1.bf16.msra.mxu0 0
    %356 = vmatprep.subr.bf16.mxu0 0
    %357 = vmatpush1.bf16.msra.mxu0 0
    %358 = vmatprep.mubr.bf16.mxu0 0
    %359 = vmatmul.mubr.bf16.gmra.mrb[0].mxu0 %v255
    %v360 = vpop.f32.mrb[0].mxu0
    %v361 = vadd.f32 %v276, %v360
    %v362 = vpop.f32.mrb[0].mxu0
    %v363 = vpop.f32.mrb[0].mxu0
    %v364 = vpop.f32.mrb[0].mxu0
    %365 = vdwg.mxu0
    %366 = vst [vmem:[#allocation2] sm:$0xff] %v361
    // Predicated region
    $region30: #{mlp_classifier_forward.1} parent=1 // pred_check
      _
    $region31: #{mlp_classifier_forward.1} parent=1 // pred_check_branch
      %368 = sbr.rel (0) target = $region33
    $region32: #{mlp_classifier_forward.1} parent=1 // pred_region
      %s370 = ssub.s32 128, 128
      %371 = vsyncadd [#allocation3], %s370
      %s373 = sshll.u32 [#allocation2], 4
      %s374 = int_to_ptr.vmem [resolvable:$true] %s373
      %376 = dma.vmem_to_hbm [thread:$0]  %s374, 128, %s7, [#allocation3]
    $region33: #{mlp_classifier_forward.1} parent=1 // pred_fallthru
      _
    // Predicated region
    $region34: #{mlp_classifier_forward.1} parent=1 // pred_check
      _
    $region35: #{mlp_classifier_forward.1} parent=1 // pred_check_branch
      %378 = sbr.rel (0) target = $region37
    $region36: #{mlp_classifier_forward.1} parent=1 // pred_region
      %379 = dma.done [#allocation3], 128
    $region37: #{mlp_classifier_forward.1} parent=1 // pred_fallthru
      _
    %380 = vsyncpa [#allocation3], 1

</llo_original>
